<compile_context>
chip_gen: v7x
topology: tpu7x:2x2x1
jax: 0.10.0
libtpu: 0.0.40
codegen_flags: <defaults>
</compile_context>

<pallas_src>
import jax
import jax.numpy as jnp
from jax.experimental import pallas as pl
from jax.experimental.pallas import tpu as pltpu


def _round_up(n, m):
    return ((n + m - 1) // m) * m


def mlp_kernel(x_ref, w1_ref, b1_ref, w2_ref, b2_ref, w3_ref, b3_ref, o_ref):
    # Feature-major: x_ref is (in_dim, TB); weights are PyTorch-layout (out_f, in_f).
    x = x_ref[...]

    h1 = jnp.dot(w1_ref[...], x, preferred_element_type=jnp.float32) + b1_ref[...]
    h1 = jnp.maximum(h1, 0.0)                                    # (32, TB)

    h2 = jnp.dot(w2_ref[...], h1, preferred_element_type=jnp.float32) + b2_ref[...]
    h2 = jnp.maximum(h2, 0.0)                                    # (16, TB)

    logits = jnp.dot(w3_ref[...], h2, preferred_element_type=jnp.float32) + b3_ref[...]

    # Softmax over the feature axis (axis 0 in feature-major layout),
    # numerically stable; reciprocal on the (otherwise idle) EUP.
    m = jnp.max(logits, axis=0, keepdims=True)
    e = jnp.exp(logits - m)
    denom = jnp.sum(e, axis=0, keepdims=True)
    o_ref[...] = (e * pl.reciprocal(denom, approx=True)).astype(o_ref.dtype)


def network_forward(x, params):
    """x: (B, in_dim) float32 -> (B, out_dim) softmax probabilities."""
    w1, b1, w2, b2, w3, b3 = (params["w1"], params["b1"],
                              params["w2"], params["b2"],
                              params["w3"], params["b3"])
    B, in_dim = x.shape
    out_dim = w3.shape[0]
    h1_dim, h2_dim = w1.shape[0], w2.shape[0]

    # Batch tile: large enough to amortize the ~0.35us/step overhead, trivially
    # small in VMEM even with double buffering (8x2048 f32 x tile = 64 KiB).
    TB = min(2048, _round_up(B, 128))
    B_pad = _round_up(B, TB)

    # Layout plumbing: present a lane-dense (features, batch) slab to the kernel.
    # (A real pipeline would hand over feature-major activations directly and
    #  these wrapper transposes/pads disappear.)
    x_t = x.T                                  # (in_dim, B)
    if B_pad != B:
        x_t = jnp.pad(x_t, ((0, 0), (0, B_pad - B)))

    grid = (B_pad // TB,)

    # Weights/biases: constant index_map => fetched once, resident in VMEM.
    const_spec = lambda a: pl.BlockSpec(a.shape, lambda i: (0,) * a.ndim)

    weight_bytes = sum(int(a.size) * a.dtype.itemsize
                       for a in (w1, b1, w2, b2, w3, b3))
    cost = pl.CostEstimate(
        flops=2 * B_pad * (in_dim * h1_dim + h1_dim * h2_dim + h2_dim * out_dim),
        transcendentals=B_pad * out_dim,
        bytes_accessed=4 * B_pad * (in_dim + out_dim) + weight_bytes,
    )

    out_t = pl.pallas_call(
        mlp_kernel,
        out_shape=jax.ShapeDtypeStruct((out_dim, B_pad), jnp.float32),
        grid=grid,
        in_specs=[
            pl.BlockSpec((in_dim, TB), lambda i: (0, i)),   # stream x over batch
            const_spec(w1), const_spec(b1),
            const_spec(w2), const_spec(b2),
            const_spec(w3), const_spec(b3),
        ],
        out_specs=pl.BlockSpec((out_dim, TB), lambda i: (0, i)),  # lane-dense store
        compiler_params=pltpu.CompilerParams(
            dimension_semantics=("parallel",)),
        cost_estimate=cost,
    )(x_t, w1, b1, w2, b2, w3, b3)

    return out_t[:, :B].T                      # (B, out_dim)


def init_params(key, in_dim, out_dim=2):
    """Deterministic PyTorch-style init. Weights kept in PyTorch layout
    (out_features, in_features); biases as (out_features, 1) columns."""
    def linear(key, fan_in, fan_out):
        kw, kb = jax.random.split(key)
        bound = 1.0 / jnp.sqrt(fan_in)
        w = jax.random.uniform(kw, (fan_out, fan_in), jnp.float32, -bound, bound)
        b = jax.random.uniform(kb, (fan_out, 1), jnp.float32, -bound, bound)
        return w, b

    k1, k2, k3 = jax.random.split(key, 3)
    w1, b1 = linear(k1, in_dim, 32)
    w2, b2 = linear(k2, 32, 16)
    w3, b3 = linear(k3, 16, out_dim)
    return {"w1": w1, "b1": b1, "w2": w2, "b2": b2, "w3": w3, "b3": b3}


def reference_forward(x, p):
    h1 = jnp.maximum(x @ p["w1"].T + p["b1"].T, 0.0)
    h2 = jnp.maximum(h1 @ p["w2"].T + p["b2"].T, 0.0)
    logits = h2 @ p["w3"].T + p["b3"].T
    return jax.nn.softmax(logits, axis=1)


if __name__ == "__main__":
    key = jax.random.PRNGKey(0)
    kx, kp = jax.random.split(key)

    B, in_dim, out_dim = 4, 8, 2
    x = jax.random.normal(kx, (B, in_dim), dtype=jnp.float32)
    params = init_params(kp, in_dim, out_dim)

    out = network_forward(x, params)
    out = jax.block_until_ready(out)

    ref = reference_forward(x, params)
    assert out.shape == (B, out_dim)
    # approx=True reciprocal in the softmax epilogue -> allow small slack.
    assert jnp.allclose(out, ref, atol=2e-3, rtol=2e-3), "mismatch vs pure-JAX reference"

    print("KERNEL_OK")
</pallas_src>

<mosaic_0001>
module attributes {stable_mosaic.version = 11 : i64} {
  func.func @mlp_kernel(%arg0: i32, %arg1: memref<8x128xf32, #tpu.memory_space<vmem>>, %arg2: memref<32x8xf32, #tpu.memory_space<vmem>>, %arg3: memref<32x1xf32, #tpu.memory_space<vmem>>, %arg4: memref<16x32xf32, #tpu.memory_space<vmem>>, %arg5: memref<16x1xf32, #tpu.memory_space<vmem>>, %arg6: memref<2x16xf32, #tpu.memory_space<vmem>>, %arg7: memref<2x1xf32, #tpu.memory_space<vmem>>, %arg8: memref<2x128xf32, #tpu.memory_space<vmem>>) attributes {dimension_semantics = [#tpu.dimension_semantics<parallel>], iteration_bounds = array<i64: 1>, scalar_prefetch = 0 : i64, scratch_operands = 0 : i64, tpu.core_type = #tpu.core_type<tc>, window_params = [{transform_indices = @transform_0, window_bounds = array<i64: 8, 128>}, {pipeline_mode = #tpu.pipeline_mode<synchronous>, transform_indices = @transform_1, window_bounds = array<i64: 32, 8>}, {pipeline_mode = #tpu.pipeline_mode<synchronous>, transform_indices = @transform_2, window_bounds = array<i64: 32, 1>}, {pipeline_mode = #tpu.pipeline_mode<synchronous>, transform_indices = @transform_3, window_bounds = array<i64: 16, 32>}, {pipeline_mode = #tpu.pipeline_mode<synchronous>, transform_indices = @transform_4, window_bounds = array<i64: 16, 1>}, {pipeline_mode = #tpu.pipeline_mode<synchronous>, transform_indices = @transform_5, window_bounds = array<i64: 2, 16>}, {pipeline_mode = #tpu.pipeline_mode<synchronous>, transform_indices = @transform_6, window_bounds = array<i64: 2, 1>}, {transform_indices = @transform_7, window_bounds = array<i64: 2, 128>}]} {
    %c0 = arith.constant 0 : index
    %c0_0 = arith.constant 0 : index
    %0 = vector.load %arg1[%c0, %c0_0] : memref<8x128xf32, #tpu.memory_space<vmem>>, vector<8x128xf32>
    %c0_1 = arith.constant 0 : index
    %c0_2 = arith.constant 0 : index
    %1 = vector.load %arg2[%c0_1, %c0_2] : memref<32x8xf32, #tpu.memory_space<vmem>>, vector<32x8xf32>
    %cst = arith.constant dense<0.000000e+00> : vector<32x128xf32>
    %2 = tpu.matmul %1, %0, %cst {dimension_numbers = #tpu.dot_dimension_numbers<[1], [0], [0], [1], [0, 0, 1, 1], [], []>} : vector<32x8xf32>, vector<8x128xf32>, vector<32x128xf32> -> vector<32x128xf32>
    %c0_3 = arith.constant 0 : index
    %c0_4 = arith.constant 0 : index
    %3 = vector.load %arg3[%c0_3, %c0_4] : memref<32x1xf32, #tpu.memory_space<vmem>>, vector<32x1xf32>
    %4 = vector.broadcast %3 : vector<32x1xf32> to vector<32x128xf32>
    %5 = arith.addf %2, %4 : vector<32x128xf32>
    %cst_5 = arith.constant 0.000000e+00 : f32
    %6 = vector.broadcast %cst_5 : f32 to vector<32x128xf32>
    %7 = arith.maximumf %5, %6 : vector<32x128xf32>
    %c0_6 = arith.constant 0 : index
    %c0_7 = arith.constant 0 : index
    %8 = vector.load %arg4[%c0_6, %c0_7] : memref<16x32xf32, #tpu.memory_space<vmem>>, vector<16x32xf32>
    %cst_8 = arith.constant dense<0.000000e+00> : vector<16x128xf32>
    %9 = tpu.matmul %8, %7, %cst_8 {dimension_numbers = #tpu.dot_dimension_numbers<[1], [0], [0], [1], [0, 0, 1, 1], [], []>} : vector<16x32xf32>, vector<32x128xf32>, vector<16x128xf32> -> vector<16x128xf32>
    %c0_9 = arith.constant 0 : index
    %c0_10 = arith.constant 0 : index
    %10 = vector.load %arg5[%c0_9, %c0_10] : memref<16x1xf32, #tpu.memory_space<vmem>>, vector<16x1xf32>
    %11 = vector.broadcast %10 : vector<16x1xf32> to vector<16x128xf32>
    %12 = arith.addf %9, %11 : vector<16x128xf32>
    %cst_11 = arith.constant 0.000000e+00 : f32
    %13 = vector.broadcast %cst_11 : f32 to vector<16x128xf32>
    %14 = arith.maximumf %12, %13 : vector<16x128xf32>
    %c0_12 = arith.constant 0 : index
    %c0_13 = arith.constant 0 : index
    %15 = vector.load %arg6[%c0_12, %c0_13] : memref<2x16xf32, #tpu.memory_space<vmem>>, vector<2x16xf32>
    %cst_14 = arith.constant dense<0.000000e+00> : vector<2x128xf32>
    %16 = tpu.matmul %15, %14, %cst_14 {dimension_numbers = #tpu.dot_dimension_numbers<[1], [0], [0], [1], [0, 0, 1, 1], [], []>} : vector<2x16xf32>, vector<16x128xf32>, vector<2x128xf32> -> vector<2x128xf32>
    %c0_15 = arith.constant 0 : index
    %c0_16 = arith.constant 0 : index
    %17 = vector.load %arg7[%c0_15, %c0_16] : memref<2x1xf32, #tpu.memory_space<vmem>>, vector<2x1xf32>
    %18 = vector.broadcast %17 : vector<2x1xf32> to vector<2x128xf32>
    %19 = arith.addf %16, %18 : vector<2x128xf32>
    %cst_17 = arith.constant dense<0xFF800000> : vector<128xf32>
    %20 = vector.multi_reduction <maximumf>, %19, %cst_17 [0] : vector<2x128xf32> to vector<128xf32>
    %21 = vector.shape_cast %20 : vector<128xf32> to vector<1x128xf32>
    %22 = vector.broadcast %21 : vector<1x128xf32> to vector<2x128xf32>
    %23 = arith.subf %19, %22 : vector<2x128xf32>
    %24 = math.exp %23 : vector<2x128xf32>
    %cst_18 = arith.constant dense<0.000000e+00> : vector<128xf32>
    %25 = vector.multi_reduction <add>, %24, %cst_18 [0] : vector<2x128xf32> to vector<128xf32>
    %26 = vector.shape_cast %25 : vector<128xf32> to vector<1x128xf32>
    %27 = tpu.reciprocal %26 {approx = true} : vector<1x128xf32> -> vector<1x128xf32>
    %28 = vector.broadcast %27 : vector<1x128xf32> to vector<2x128xf32>
    %29 = arith.mulf %24, %28 : vector<2x128xf32>
    %c0_19 = arith.constant 0 : index
    %c0_20 = arith.constant 0 : index
    %30 = vector.load %arg8[%c0_19, %c0_20] : memref<2x128xf32, #tpu.memory_space<vmem>>, vector<2x128xf32>
    tpu.vector_store %arg8[%c0_19, %c0_20], %29 {strides = array<i32>} : memref<2x128xf32, #tpu.memory_space<vmem>>, vector<2x128xf32>,
    return
  }
  func.func @transform_0(%arg0: i32) -> (i32, i32) {
    %c0_i32 = arith.constant 0 : i32
    %c0_i32_0 = arith.constant 0 : i32
    return %c0_i32, %arg0 : i32, i32
  }
  func.func @transform_1(%arg0: i32) -> (i32, i32) {
    %c0_i32 = arith.constant 0 : i32
    %c0_i32_0 = arith.constant 0 : i32
    %c0_i32_1 = arith.constant 0 : i32
    return %c0_i32, %c0_i32_0 : i32, i32
  }
  func.func @transform_2(%arg0: i32) -> (i32, i32) {
    %c0_i32 = arith.constant 0 : i32
    %c0_i32_0 = arith.constant 0 : i32
    %c0_i32_1 = arith.constant 0 : i32
    return %c0_i32, %c0_i32_0 : i32, i32
  }
  func.func @transform_3(%arg0: i32) -> (i32, i32) {
    %c0_i32 = arith.constant 0 : i32
    %c0_i32_0 = arith.constant 0 : i32
    %c0_i32_1 = arith.constant 0 : i32
    return %c0_i32, %c0_i32_0 : i32, i32
  }
  func.func @transform_4(%arg0: i32) -> (i32, i32) {
    %c0_i32 = arith.constant 0 : i32
    %c0_i32_0 = arith.constant 0 : i32
    %c0_i32_1 = arith.constant 0 : i32
    return %c0_i32, %c0_i32_0 : i32, i32
  }
  func.func @transform_5(%arg0: i32) -> (i32, i32) {
    %c0_i32 = arith.constant 0 : i32
    %c0_i32_0 = arith.constant 0 : i32
    %c0_i32_1 = arith.constant 0 : i32
    return %c0_i32, %c0_i32_0 : i32, i32
  }
  func.func @transform_6(%arg0: i32) -> (i32, i32) {
    %c0_i32 = arith.constant 0 : i32
    %c0_i32_0 = arith.constant 0 : i32
    %c0_i32_1 = arith.constant 0 : i32
    return %c0_i32, %c0_i32_0 : i32, i32
  }
  func.func @transform_7(%arg0: i32) -> (i32, i32) {
    %c0_i32 = arith.constant 0 : i32
    %c0_i32_0 = arith.constant 0 : i32
    return %c0_i32, %arg0 : i32, i32
  }
}

</mosaic_0001>

<llo_original>
// kernel: tpu_custom_call.1
$region0: #{tpu_custom_call.1}
  #allocation0 [shape = 'u32[]', space=smem, size = 0x4, offset = 0x4, fixed_abs, tag = 'smem constant byte address 0x4 - core index']
  #allocation1 [shape = 'u32[144,128]{1,0:T(1,128)}', space=vmem, size = 0x12000, scoped, tag = 'internal scratch']
  %s0 = inlined_call_operand.vmem [shape: f32[8,128], index: 0, kind: input, shape index: {}]
  %s1 = inlined_call_operand.vmem [shape: f32[32,8], index: 1, kind: input, shape index: {}]
  %s2 = inlined_call_operand.vmem [shape: f32[32,1], index: 2, kind: input, shape index: {}]
  %s3 = inlined_call_operand.vmem [shape: f32[16,32], index: 3, kind: input, shape index: {}]
  %s4 = inlined_call_operand.vmem [shape: f32[16,1], index: 4, kind: input, shape index: {}]
  %s5 = inlined_call_operand.vmem [shape: f32[2,16], index: 5, kind: input, shape index: {}]
  %s6 = inlined_call_operand.vmem [shape: f32[2,1], index: 6, kind: input, shape index: {}]
  %s7 = inlined_call_operand.hbm [shape: f32[2,128], index: 7, kind: output, shape index: {}]
  %s8 = sld [smem:[#allocation0]]
  $region38: #{tpu_custom_call.1} parent=0
    _
  %s10 = ssub.s32 1, %s8
  %s11 = scalar_select 0, %s10, %s8
  $region1: #{tpu_custom_call.1} parent=0
    #allocation2 [shape = 'u8[1024]{0}', space=vmem, size = 0x400, scoped, tag = 'output window, operand 0, single buffered']
    #allocation3 [shape = 's32[1]{0}', space=sflag, size = 0x4, scoped, tag = 'scoped memory for tpu_custom_call.1']
    %12 = vsyncpa [#allocation3], 0
    // Predicated region
    $region2: #{tpu_custom_call.1} parent=1 // pred_check
      _
    $region3: #{tpu_custom_call.1} parent=1 // pred_check_branch
      %14 = sbr.rel (0) target = $region5
    $region4: #{tpu_custom_call.1} parent=1 // pred_region
      _
    $region5: #{tpu_custom_call.1} parent=1 // pred_fallthru
      _
    // Predicated region
    $region6: #{tpu_custom_call.1} parent=1 // pred_check
      _
    $region7: #{tpu_custom_call.1} parent=1 // pred_check_branch
      %16 = sbr.rel (0) target = $region9
    $region8: #{tpu_custom_call.1} parent=1 // pred_region
      _
    $region9: #{tpu_custom_call.1} parent=1 // pred_fallthru
      _
    // Predicated region
    $region10: #{tpu_custom_call.1} parent=1 // pred_check
      _
    $region11: #{tpu_custom_call.1} parent=1 // pred_check_branch
      %18 = sbr.rel (0) target = $region13
    $region12: #{tpu_custom_call.1} parent=1 // pred_region
      _
    $region13: #{tpu_custom_call.1} parent=1 // pred_fallthru
      _
    // Predicated region
    $region14: #{tpu_custom_call.1} parent=1 // pred_check
      _
    $region15: #{tpu_custom_call.1} parent=1 // pred_check_branch
      %20 = sbr.rel (0) target = $region17
    $region16: #{tpu_custom_call.1} parent=1 // pred_region
      _
    $region17: #{tpu_custom_call.1} parent=1 // pred_fallthru
      _
    // Predicated region
    $region18: #{tpu_custom_call.1} parent=1 // pred_check
      _
    $region19: #{tpu_custom_call.1} parent=1 // pred_check_branch
      %22 = sbr.rel (0) target = $region21
    $region20: #{tpu_custom_call.1} parent=1 // pred_region
      _
    $region21: #{tpu_custom_call.1} parent=1 // pred_fallthru
      _
    // Predicated region
    $region22: #{tpu_custom_call.1} parent=1 // pred_check
      _
    $region23: #{tpu_custom_call.1} parent=1 // pred_check_branch
      %24 = sbr.rel (0) target = $region25
    $region24: #{tpu_custom_call.1} parent=1 // pred_region
      _
    $region25: #{tpu_custom_call.1} parent=1 // pred_fallthru
      _
    // Predicated region
    $region26: #{tpu_custom_call.1} parent=1 // pred_check
      _
    $region27: #{tpu_custom_call.1} parent=1 // pred_check_branch
      %26 = sbr.rel (0) target = $region29
    $region28: #{tpu_custom_call.1} parent=1 // pred_region
      _
    $region29: #{tpu_custom_call.1} parent=1 // pred_fallthru
      _
    %v27 = vld [vmem:[%s0] sm:$0xff]
    %v28 = vld [vmem:[%s1] sm:$0xff]
    %v29 = vld [vmem:[%s1 + $0x8] sm:$0xff]
    %v30 = vld [vmem:[%s1 + $0x10] sm:$0xff]
    %v31 = vld [vmem:[%s1 + $0x18] sm:$0xff]
    %v32 = vld [vmem:[%s2] sm:$0xff]
    %v33 = vld [vmem:[%s2 + $0x8] sm:$0xff]
    %v34 = vld [vmem:[%s2 + $0x10] sm:$0xff]
    %v35 = vld [vmem:[%s2 + $0x18] sm:$0xff]
    %37 = vset.pattern.permute.xlu0 0
    %38 = vperm.xlu0 %37, %v32
    %v39 = vpop.permute.xlu0 %38
    %42 = vset.pattern.permute.xlu0 0
    %43 = vperm.xlu0 %42, %v33
    %v44 = vpop.permute.xlu0 %43
    %47 = vset.pattern.permute.xlu0 0
    %48 = vperm.xlu0 %47, %v34
    %v49 = vpop.permute.xlu0 %48
    %52 = vset.pattern.permute.xlu0 0
    %53 = vperm.xlu0 %52, %v35
    %v54 = vpop.permute.xlu0 %53
    %vm56 = vcmask 64512
    %v58 = vsel %vm56, %v28, 0
    %v61 = vsel %vm56, %v29, 0
    %v64 = vsel %vm56, %v30, 0
    %v67 = vsel %vm56, %v31, 0
    %69 = vmatprep.subr.mxu0 0.0
    %70 = vmatpush1.msra.mxu0 %v27
    %71 = vmatprep.subr.mxu0 0.0
    %72 = vmatpush1.msra.mxu0 0.0
    %73 = vmatprep.subr.mxu0 0.0
    %74 = vmatpush1.msra.mxu0 0.0
    %75 = vmatprep.subr.mxu0 0.0
    %76 = vmatpush1.msra.mxu0 0.0
    %77 = vmatprep.subr.mxu0 0.0
    %78 = vmatpush1.msra.mxu0 0.0
    %79 = vmatprep.subr.mxu0 0.0
    %80 = vmatpush1.msra.mxu0 0.0
    %81 = vmatprep.subr.mxu0 0.0
    %82 = vmatpush1.msra.mxu0 0.0
    %83 = vmatprep.subr.mxu0 0.0
    %84 = vmatpush1.msra.mxu0 0.0
    %85 = vmatprep.subr.mxu0 0.0
    %86 = vmatpush1.msra.mxu0 0.0
    %87 = vmatprep.subr.mxu0 0.0
    %88 = vmatpush1.msra.mxu0 0.0
    %89 = vmatprep.subr.mxu0 0.0
    %90 = vmatpush1.msra.mxu0 0.0
    %91 = vmatprep.subr.mxu0 0.0
    %92 = vmatpush1.msra.mxu0 0.0
    %93 = vmatprep.subr.mxu0 0.0
    %94 = vmatpush1.msra.mxu0 0.0
    %95 = vmatprep.subr.mxu0 0.0
    %96 = vmatpush1.msra.mxu0 0.0
    %97 = vmatprep.subr.mxu0 0.0
    %98 = vmatpush1.msra.mxu0 0.0
    %99 = vmatprep.subr.mxu0 0.0
    %100 = vmatpush1.msra.mxu0 0.0
    %101 = vmatprep.subr.mxu0 0.0
    %102 = vmatpush1.msra.mxu0 0.0
    %103 = vmatprep.subr.mxu0 0.0
    %104 = vmatpush1.msra.mxu0 0.0
    %105 = vmatprep.subr.mxu0 0.0
    %106 = vmatpush1.msra.mxu0 0.0
    %107 = vmatprep.subr.mxu0 0.0
    %108 = vmatpush1.msra.mxu0 0.0
    %109 = vmatprep.subr.mxu0 0.0
    %110 = vmatpush1.msra.mxu0 0.0
    %111 = vmatprep.subr.mxu0 0.0
    %112 = vmatpush1.msra.mxu0 0.0
    %113 = vmatprep.subr.mxu0 0.0
    %114 = vmatpush1.msra.mxu0 0.0
    %115 = vmatprep.subr.mxu0 0.0
    %116 = vmatpush1.msra.mxu0 0.0
    %117 = vmatprep.subr.mxu0 0.0
    %118 = vmatpush1.msra.mxu0 0.0
    %119 = vmatprep.subr.mxu0 0.0
    %120 = vmatpush1.msra.mxu0 0.0
    %121 = vmatprep.subr.mxu0 0.0
    %122 = vmatpush1.msra.mxu0 0.0
    %123 = vmatprep.subr.mxu0 0.0
    %124 = vmatpush1.msra.mxu0 0.0
    %125 = vmatprep.subr.mxu0 0.0
    %126 = vmatpush1.msra.mxu0 0.0
    %127 = vmatprep.subr.mxu0 0.0
    %128 = vmatpush1.msra.mxu0 0.0
    %129 = vmatprep.subr.mxu0 0.0
    %130 = vmatpush1.msra.mxu0 0.0
    %131 = vmatprep.subr.mxu0 0.0
    %132 = vmatpush1.msra.mxu0 0.0
    %133 = vmatprep.mubr.f32.mxu0 0.0
    %134 = vmatmul.mubr.f32.gmra.mrb[0].mxu0 %v58
    %v135 = vpop.f32.mrb[0].mxu0
    %v136 = vadd.f32 %v39, %v135
    %v137 = vpop.f32.mrb[0].mxu0
    %138 = vmatprep.mubr.f32.mxu0 0.0
    %139 = vmatmul.mubr.f32.gmra.mrb[0].mxu0 %v61
    %v140 = vpop.f32.mrb[0].mxu0
    %v141 = vadd.f32 %v44, %v140
    %v142 = vpop.f32.mrb[0].mxu0
    %143 = vmatprep.mubr.f32.mxu0 0.0
    %144 = vmatmul.mubr.f32.gmra.mrb[0].mxu0 %v64
    %v145 = vpop.f32.mrb[0].mxu0
    %v146 = vadd.f32 %v49, %v145
    %v147 = vpop.f32.mrb[0].mxu0
    %148 = vmatprep.mubr.f32.mxu0 0.0
    %149 = vmatmul.mubr.f32.gmra.mrb[0].mxu0 %v67
    %v150 = vpop.f32.mrb[0].mxu0
    %v151 = vadd.f32 %v54, %v150
    %v152 = vpop.f32.mrb[0].mxu0
    %153 = vdwg.mxu0
    %v154 = vmax.f32 %v136, 0.0
    %v155 = vmax.f32 %v141, 0.0
    %v156 = vmax.f32 %v146, 0.0
    %v157 = vmax.f32 %v151, 0.0
    %v158 = vld [vmem:[%s3] sm:$0xff]
    %v159 = vld [vmem:[%s3 + $0x8] sm:$0xff]
    %v160 = vld [vmem:[%s4] sm:$0xff]
    %v161 = vld [vmem:[%s4 + $0x8] sm:$0xff]
    %163 = vset.pattern.permute.xlu0 0
    %164 = vperm.xlu0 %163, %v160
    %v165 = vpop.permute.xlu0 %164
    %168 = vset.pattern.permute.xlu0 0
    %169 = vperm.xlu0 %168, %v161
    %v170 = vpop.permute.xlu0 %169
    %vm172 = vcmask 261120
    %v174 = vsel %vm172, %v158, 0
    %v177 = vsel %vm172, %v159, 0
    %179 = vmatprep.subr.mxu0 0.0
    %180 = vmatpush1.msra.mxu0 %v154
    %181 = vmatprep.subr.mxu0 0.0
    %182 = vmatpush1.msra.mxu0 %v155
    %183 = vmatprep.subr.mxu0 0.0
    %184 = vmatpush1.msra.mxu0 %v156
    %185 = vmatprep.subr.mxu0 0.0
    %186 = vmatpush1.msra.mxu0 %v157
    %187 = vmatprep.subr.mxu0 0.0
    %188 = vmatpush1.msra.mxu0 0.0
    %189 = vmatprep.subr.mxu0 0.0
    %190 = vmatpush1.msra.mxu0 0.0
    %191 = vmatprep.subr.mxu0 0.0
    %192 = vmatpush1.msra.mxu0 0.0
    %193 = vmatprep.subr.mxu0 0.0
    %194 = vmatpush1.msra.mxu0 0.0
    %195 = vmatprep.subr.mxu0 0.0
    %196 = vmatpush1.msra.mxu0 0.0
    %197 = vmatprep.subr.mxu0 0.0
    %198 = vmatpush1.msra.mxu0 0.0
    %199 = vmatprep.subr.mxu0 0.0
    %200 = vmatpush1.msra.mxu0 0.0
    %201 = vmatprep.subr.mxu0 0.0
    %202 = vmatpush1.msra.mxu0 0.0
    %203 = vmatprep.subr.mxu0 0.0
    %204 = vmatpush1.msra.mxu0 0.0
    %205 = vmatprep.subr.mxu0 0.0
    %206 = vmatpush1.msra.mxu0 0.0
    %207 = vmatprep.subr.mxu0 0.0
    %208 = vmatpush1.msra.mxu0 0.0
    %209 = vmatprep.subr.mxu0 0.0
    %210 = vmatpush1.msra.mxu0 0.0
    %211 = vmatprep.subr.mxu0 0.0
    %212 = vmatpush1.msra.mxu0 0.0
    %213 = vmatprep.subr.mxu0 0.0
    %214 = vmatpush1.msra.mxu0 0.0
    %215 = vmatprep.subr.mxu0 0.0
    %216 = vmatpush1.msra.mxu0 0.0
    %217 = vmatprep.subr.mxu0 0.0
    %218 = vmatpush1.msra.mxu0 0.0
    %219 = vmatprep.subr.mxu0 0.0
    %220 = vmatpush1.msra.mxu0 0.0
    %221 = vmatprep.subr.mxu0 0.0
    %222 = vmatpush1.msra.mxu0 0.0
    %223 = vmatprep.subr.mxu0 0.0
    %224 = vmatpush1.msra.mxu0 0.0
    %225 = vmatprep.subr.mxu0 0.0
    %226 = vmatpush1.msra.mxu0 0.0
    %227 = vmatprep.subr.mxu0 0.0
    %228 = vmatpush1.msra.mxu0 0.0
    %229 = vmatprep.subr.mxu0 0.0
    %230 = vmatpush1.msra.mxu0 0.0
    %231 = vmatprep.subr.mxu0 0.0
    %232 = vmatpush1.msra.mxu0 0.0
    %233 = vmatprep.subr.mxu0 0.0
    %234 = vmatpush1.msra.mxu0 0.0
    %235 = vmatprep.subr.mxu0 0.0
    %236 = vmatpush1.msra.mxu0 0.0
    %237 = vmatprep.subr.mxu0 0.0
    %238 = vmatpush1.msra.mxu0 0.0
    %239 = vmatprep.subr.mxu0 0.0
    %240 = vmatpush1.msra.mxu0 0.0
    %241 = vmatprep.subr.mxu0 0.0
    %242 = vmatpush1.msra.mxu0 0.0
    %243 = vmatprep.mubr.f32.mxu0 0.0
    %244 = vmatmul.mubr.f32.gmra.mrb[0].mxu0 %v174
    %v245 = vpop.f32.mrb[0].mxu0
    %v246 = vadd.f32 %v165, %v245
    %v247 = vpop.f32.mrb[0].mxu0
    %248 = vmatprep.mubr.f32.mxu0 0.0
    %249 = vmatmul.mubr.f32.gmra.mrb[0].mxu0 %v177
    %v250 = vpop.f32.mrb[0].mxu0
    %v251 = vadd.f32 %v170, %v250
    %v252 = vpop.f32.mrb[0].mxu0
    %253 = vdwg.mxu0
    %v254 = vmax.f32 %v246, 0.0
    %v255 = vmax.f32 %v251, 0.0
    %v256 = vld [vmem:[%s5] sm:$0x3]
    %v257 = vld [vmem:[%s6] sm:$0x3]
    %259 = vset.pattern.permute.xlu0 0
    %260 = vperm.xlu0 %259, %v257
    %v261 = vpop.permute.xlu0 %260
    %vm263 = vcmask 130048
    %v265 = vsel %vm263, %v256, 0
    %267 = vmatprep.subr.mxu0 0.0
    %268 = vmatpush1.msra.mxu0 %v254
    %269 = vmatprep.subr.mxu0 0.0
    %270 = vmatpush1.msra.mxu0 %v255
    %271 = vmatprep.subr.mxu0 0.0
    %272 = vmatpush1.msra.mxu0 0.0
    %273 = vmatprep.subr.mxu0 0.0
    %274 = vmatpush1.msra.mxu0 0.0
    %275 = vmatprep.subr.mxu0 0.0
    %276 = vmatpush1.msra.mxu0 0.0
    %277 = vmatprep.subr.mxu0 0.0
    %278 = vmatpush1.msra.mxu0 0.0
    %279 = vmatprep.subr.mxu0 0.0
    %280 = vmatpush1.msra.mxu0 0.0
    %281 = vmatprep.subr.mxu0 0.0
    %282 = vmatpush1.msra.mxu0 0.0
    %283 = vmatprep.subr.mxu0 0.0
    %284 = vmatpush1.msra.mxu0 0.0
    %285 = vmatprep.subr.mxu0 0.0
    %286 = vmatpush1.msra.mxu0 0.0
    %287 = vmatprep.subr.mxu0 0.0
    %288 = vmatpush1.msra.mxu0 0.0
    %289 = vmatprep.subr.mxu0 0.0
    %290 = vmatpush1.msra.mxu0 0.0
    %291 = vmatprep.subr.mxu0 0.0
    %292 = vmatpush1.msra.mxu0 0.0
    %293 = vmatprep.subr.mxu0 0.0
    %294 = vmatpush1.msra.mxu0 0.0
    %295 = vmatprep.subr.mxu0 0.0
    %296 = vmatpush1.msra.mxu0 0.0
    %297 = vmatprep.subr.mxu0 0.0
    %298 = vmatpush1.msra.mxu0 0.0
    %299 = vmatprep.subr.mxu0 0.0
    %300 = vmatpush1.msra.mxu0 0.0
    %301 = vmatprep.subr.mxu0 0.0
    %302 = vmatpush1.msra.mxu0 0.0
    %303 = vmatprep.subr.mxu0 0.0
    %304 = vmatpush1.msra.mxu0 0.0
    %305 = vmatprep.subr.mxu0 0.0
    %306 = vmatpush1.msra.mxu0 0.0
    %307 = vmatprep.subr.mxu0 0.0
    %308 = vmatpush1.msra.mxu0 0.0
    %309 = vmatprep.subr.mxu0 0.0
    %310 = vmatpush1.msra.mxu0 0.0
    %311 = vmatprep.subr.mxu0 0.0
    %312 = vmatpush1.msra.mxu0 0.0
    %313 = vmatprep.subr.mxu0 0.0
    %314 = vmatpush1.msra.mxu0 0.0
    %315 = vmatprep.subr.mxu0 0.0
    %316 = vmatpush1.msra.mxu0 0.0
    %317 = vmatprep.subr.mxu0 0.0
    %318 = vmatpush1.msra.mxu0 0.0
    %319 = vmatprep.subr.mxu0 0.0
    %320 = vmatpush1.msra.mxu0 0.0
    %321 = vmatprep.subr.mxu0 0.0
    %322 = vmatpush1.msra.mxu0 0.0
    %323 = vmatprep.subr.mxu0 0.0
    %324 = vmatpush1.msra.mxu0 0.0
    %325 = vmatprep.subr.mxu0 0.0
    %326 = vmatpush1.msra.mxu0 0.0
    %327 = vmatprep.subr.mxu0 0.0
    %328 = vmatpush1.msra.mxu0 0.0
    %329 = vmatprep.subr.mxu0 0.0
    %330 = vmatpush1.msra.mxu0 0.0
    %331 = vmatprep.mubr.f32.mxu0 0.0
    %332 = vmatmul.mubr.f32.gmra.mrb[0].mxu0 %v265
    %v333 = vpop.f32.mrb[0].mxu0
    %v334 = vadd.f32 %v261, %v333
    %v335 = vpop.f32.mrb[0].mxu0
    %336 = vdwg.mxu0
    %vm337 = vcmask 1041408
    %v338 = vsel %vm337, %v334, -inf
    %v339 = vrot.slane %v338, 4
    %v340 = vmax.f32 %v338, %v339
    %v341 = vrot.slane %v340, 2
    %v342 = vmax.f32 %v340, %v341
    %v343 = vrot.slane %v342, 1
    %v344 = vmax.f32 %v342, %v343
    %v345 = vsub.f32 %v334, %v344
    %v346 = vmul.f32 %v345, 1.442695
    %v347 = vpow.pop %v346
    %v348 = vsel %vm337, %v347, 0.0
    %v349 = vrot.slane %v348, 4
    %v350 = vadd.f32 %v348, %v349
    %v351 = vrot.slane %v350, 2
    %v352 = vadd.f32 %v350, %v351
    %v353 = vrot.slane %v352, 1
    %v354 = vadd.f32 %v352, %v353
    %v355 = vrcp.pop %v354
    %v356 = vmul.f32 %v347, %v355
    %357 = vst [vmem:[#allocation2] sm:$0x3] %v356
    // Predicated region
    $region30: #{tpu_custom_call.1} parent=1 // pred_check
      _
    $region31: #{tpu_custom_call.1} parent=1 // pred_check_branch
      %359 = sbr.rel (0) target = $region33
    $region32: #{tpu_custom_call.1} parent=1 // pred_region
      %s361 = ssub.s32 32, 32
      %362 = vsyncadd [#allocation3], %s361
      %s364 = sshll.u32 [#allocation2], 4
      %s365 = int_to_ptr.vmem [resolvable:$true] %s364
      %367 = dma.vmem_to_hbm [thread:$0]  %s365, 32, %s7, [#allocation3]
    $region33: #{tpu_custom_call.1} parent=1 // pred_fallthru
      _
    // Predicated region
    $region34: #{tpu_custom_call.1} parent=1 // pred_check
      _
    $region35: #{tpu_custom_call.1} parent=1 // pred_check_branch
      %369 = sbr.rel (0) target = $region37
    $region36: #{tpu_custom_call.1} parent=1 // pred_region
      %370 = dma.done [#allocation3], 32
    $region37: #{tpu_custom_call.1} parent=1 // pred_fallthru
      _
    %371 = vsyncpa [#allocation3], 1

</llo_original>
